<compile_context>
chip_gen: v7x
topology: tpu7x:2x2x1
jax: 0.10.0
libtpu: 0.0.40
codegen_flags: <defaults>
</compile_context>

<pallas_src>
import jax
import jax.numpy as jnp
from jax.experimental import pallas as pl
from jax.experimental.pallas import tpu as pltpu

HIDDEN = 50          # fixed by the module definition (nn.Linear(state, 50))
HIDDEN_PADDED = 128  # lane-dense padded hidden width


def dqn_mlp_kernel(x_ref, w1_ref, b1_ref, w2_ref, b2_ref, o_ref):
    # fc1 + relu: bf16 MXU matmul, f32 accumulate, f32 bias add / relu on VPU.
    x = x_ref[...]
    h = jnp.dot(x, w1_ref[...], preferred_element_type=jnp.float32) + b1_ref[...]
    h = jnp.maximum(h, 0.0)
    # fc2: cast activations back to bf16 for the MXU, accumulate in f32.
    y = jnp.dot(h.astype(jnp.bfloat16), w2_ref[...],
                preferred_element_type=jnp.float32) + b2_ref[...]
    o_ref[...] = y.astype(o_ref.dtype)


def dqnet_state_forward(x, w1, b1, w2, b2, *, tile_b=8192):
    """x: [B, state] f32; w1: [state, 50] f32; b1: [1, 50] f32;
    w2: [50, A] f32; b2: [1, A] f32.  Returns [B, A] f32."""
    B, S = x.shape
    H, A = w2.shape
    assert w1.shape == (S, H) and b1.shape == (1, H) and b2.shape == (1, A)

    # --- Lane-pad the hidden dimension 50 -> 128 (zero fill; math unchanged).
    hp = HIDDEN_PADDED
    w1_p = jnp.zeros((S, hp), jnp.bfloat16).at[:, :H].set(w1.astype(jnp.bfloat16))
    b1_p = jnp.zeros((1, hp), jnp.float32).at[:, :H].set(b1)
    w2_p = jnp.zeros((hp, A), jnp.bfloat16).at[:H, :].set(w2.astype(jnp.bfloat16))
    b2_f = b2.astype(jnp.float32)

    # --- bf16 activations at the call boundary (f32 accumulation in-kernel).
    x_bf = x.astype(jnp.bfloat16)

    # --- Tile the batch dim. Block second-to-last dim must be divisible by 8
    #     or equal the full dim; tb == B covers small batches, otherwise pad B
    #     to a multiple of tile_b (tile_b is a multiple of 8).
    if B <= tile_b:
        tb = B
        Bp = B
        x_in = x_bf
    else:
        tb = tile_b
        Bp = pl.cdiv(B, tb) * tb
        x_in = jnp.pad(x_bf, ((0, Bp - B), (0, 0)))

    grid = (Bp // tb,)

    weight_bytes = (w1_p.size * 2 + w2_p.size * 2 + b1_p.size * 4 + b2_f.size * 4)
    cost = pl.CostEstimate(
        flops=2 * Bp * (S * hp + hp * A),
        transcendentals=0,
        bytes_accessed=Bp * S * 2 + Bp * A * 4 + weight_bytes,
    )

    out = pl.pallas_call(
        dqn_mlp_kernel,
        out_shape=jax.ShapeDtypeStruct((Bp, A), jnp.float32),
        grid=grid,
        in_specs=[
            pl.BlockSpec((tb, S), lambda i: (i, 0)),     # x: streamed per tile
            pl.BlockSpec((S, hp), lambda i: (0, 0)),     # W1: resident
            pl.BlockSpec((1, hp), lambda i: (0, 0)),     # b1: resident
            pl.BlockSpec((hp, A), lambda i: (0, 0)),     # W2: resident
            pl.BlockSpec((1, A), lambda i: (0, 0)),      # b2: resident
        ],
        out_specs=pl.BlockSpec((tb, A), lambda i: (i, 0)),
        compiler_params=pltpu.CompilerParams(
            dimension_semantics=("parallel",),           # 2x on v7x megacore
        ),
        cost_estimate=cost,
    )(x_in, w1_p, b1_p, w2_p, b2_f)

    return out[:B] if Bp != B else out


def init_params(key, state_dim, action_dims):
    """Deterministic init mirroring the module: weights ~ N(0, 0.1),
    biases ~ U(-1/sqrt(fan_in), 1/sqrt(fan_in)) (PyTorch Linear default)."""
    k1, k2, k3, k4 = jax.random.split(key, 4)
    # PyTorch stores weight as [out, in]; we store the transpose [in, out].
    w1 = jax.random.normal(k1, (state_dim, HIDDEN), jnp.float32) * 0.1
    w2 = jax.random.normal(k2, (HIDDEN, action_dims), jnp.float32) * 0.1
    bound1 = 1.0 / jnp.sqrt(jnp.float32(state_dim))
    bound2 = 1.0 / jnp.sqrt(jnp.float32(HIDDEN))
    b1 = jax.random.uniform(k3, (1, HIDDEN), jnp.float32, -bound1, bound1)
    b2 = jax.random.uniform(k4, (1, action_dims), jnp.float32, -bound2, bound2)
    return w1, b1, w2, b2


if __name__ == "__main__":
    key = jax.random.PRNGKey(0)
    batch = 2
    state_dim = 16
    action_dims = 8

    k_x, k_p = jax.random.split(key)
    x = jax.random.normal(k_x, (batch, state_dim), jnp.float32)
    w1, b1, w2, b2 = init_params(k_p, state_dim, action_dims)

    y = dqnet_state_forward(x, w1, b1, w2, b2)
    jax.block_until_ready(y)

    # Pure-JAX f32 reference of the same math (kernel uses bf16 inputs with
    # f32 accumulation, so allow bf16-level tolerance).
    ref = jnp.maximum(x @ w1 + b1, 0.0) @ w2 + b2
    assert y.shape == (batch, action_dims)
    assert jnp.allclose(y, ref, atol=2e-2, rtol=2e-2), (y, ref)

    print("KERNEL_OK")
</pallas_src>

<mosaic_0001>
module attributes {stable_mosaic.version = 11 : i64} {
  func.func @dqn_mlp_kernel(%arg0: i32, %arg1: memref<2x16xbf16, #tpu.memory_space<vmem>>, %arg2: memref<16x128xbf16, #tpu.memory_space<vmem>>, %arg3: memref<1x128xf32, #tpu.memory_space<vmem>>, %arg4: memref<128x8xbf16, #tpu.memory_space<vmem>>, %arg5: memref<1x8xf32, #tpu.memory_space<vmem>>, %arg6: memref<2x8xf32, #tpu.memory_space<vmem>>) attributes {dimension_semantics = [#tpu.dimension_semantics<parallel>], iteration_bounds = array<i64: 1>, scalar_prefetch = 0 : i64, scratch_operands = 0 : i64, tpu.core_type = #tpu.core_type<tc>, window_params = [{transform_indices = @transform_0, window_bounds = array<i64: 2, 16>}, {pipeline_mode = #tpu.pipeline_mode<synchronous>, transform_indices = @transform_1, window_bounds = array<i64: 16, 128>}, {pipeline_mode = #tpu.pipeline_mode<synchronous>, transform_indices = @transform_2, window_bounds = array<i64: 1, 128>}, {pipeline_mode = #tpu.pipeline_mode<synchronous>, transform_indices = @transform_3, window_bounds = array<i64: 128, 8>}, {pipeline_mode = #tpu.pipeline_mode<synchronous>, transform_indices = @transform_4, window_bounds = array<i64: 1, 8>}, {transform_indices = @transform_5, window_bounds = array<i64: 2, 8>}]} {
    %c0 = arith.constant 0 : index
    %c0_0 = arith.constant 0 : index
    %0 = vector.load %arg1[%c0, %c0_0] : memref<2x16xbf16, #tpu.memory_space<vmem>>, vector<2x16xbf16>
    %c0_1 = arith.constant 0 : index
    %c0_2 = arith.constant 0 : index
    %1 = vector.load %arg2[%c0_1, %c0_2] : memref<16x128xbf16, #tpu.memory_space<vmem>>, vector<16x128xbf16>
    %cst = arith.constant dense<0.000000e+00> : vector<2x128xf32>
    %2 = tpu.matmul %0, %1, %cst {dimension_numbers = #tpu.dot_dimension_numbers<[1], [0], [0], [1], [0, 0, 1, 1], [], []>} : vector<2x16xbf16>, vector<16x128xbf16>, vector<2x128xf32> -> vector<2x128xf32>
    %c0_3 = arith.constant 0 : index
    %c0_4 = arith.constant 0 : index
    %3 = vector.load %arg3[%c0_3, %c0_4] : memref<1x128xf32, #tpu.memory_space<vmem>>, vector<1x128xf32>
    %4 = vector.broadcast %3 : vector<1x128xf32> to vector<2x128xf32>
    %5 = arith.addf %2, %4 : vector<2x128xf32>
    %cst_5 = arith.constant 0.000000e+00 : f32
    %6 = vector.broadcast %cst_5 : f32 to vector<2x128xf32>
    %7 = arith.maximumf %5, %6 : vector<2x128xf32>
    %8 = arith.truncf %7 : vector<2x128xf32> to vector<2x128xbf16>
    %c0_6 = arith.constant 0 : index
    %c0_7 = arith.constant 0 : index
    %9 = vector.load %arg4[%c0_6, %c0_7] : memref<128x8xbf16, #tpu.memory_space<vmem>>, vector<128x8xbf16>
    %cst_8 = arith.constant dense<0.000000e+00> : vector<2x8xf32>
    %10 = tpu.matmul %8, %9, %cst_8 {dimension_numbers = #tpu.dot_dimension_numbers<[1], [0], [0], [1], [0, 0, 1, 1], [], []>} : vector<2x128xbf16>, vector<128x8xbf16>, vector<2x8xf32> -> vector<2x8xf32>
    %c0_9 = arith.constant 0 : index
    %c0_10 = arith.constant 0 : index
    %11 = vector.load %arg5[%c0_9, %c0_10] : memref<1x8xf32, #tpu.memory_space<vmem>>, vector<1x8xf32>
    %12 = vector.broadcast %11 : vector<1x8xf32> to vector<2x8xf32>
    %13 = arith.addf %10, %12 : vector<2x8xf32>
    %c0_11 = arith.constant 0 : index
    %c0_12 = arith.constant 0 : index
    %14 = vector.load %arg6[%c0_11, %c0_12] : memref<2x8xf32, #tpu.memory_space<vmem>>, vector<2x8xf32>
    tpu.vector_store %arg6[%c0_11, %c0_12], %13 {strides = array<i32>} : memref<2x8xf32, #tpu.memory_space<vmem>>, vector<2x8xf32>,
    return
  }
  func.func @transform_0(%arg0: i32) -> (i32, i32) {
    %c0_i32 = arith.constant 0 : i32
    %c0_i32_0 = arith.constant 0 : i32
    return %arg0, %c0_i32 : i32, i32
  }
  func.func @transform_1(%arg0: i32) -> (i32, i32) {
    %c0_i32 = arith.constant 0 : i32
    %c0_i32_0 = arith.constant 0 : i32
    %c0_i32_1 = arith.constant 0 : i32
    return %c0_i32, %c0_i32_0 : i32, i32
  }
  func.func @transform_2(%arg0: i32) -> (i32, i32) {
    %c0_i32 = arith.constant 0 : i32
    %c0_i32_0 = arith.constant 0 : i32
    %c0_i32_1 = arith.constant 0 : i32
    return %c0_i32, %c0_i32_0 : i32, i32
  }
  func.func @transform_3(%arg0: i32) -> (i32, i32) {
    %c0_i32 = arith.constant 0 : i32
    %c0_i32_0 = arith.constant 0 : i32
    %c0_i32_1 = arith.constant 0 : i32
    return %c0_i32, %c0_i32_0 : i32, i32
  }
  func.func @transform_4(%arg0: i32) -> (i32, i32) {
    %c0_i32 = arith.constant 0 : i32
    %c0_i32_0 = arith.constant 0 : i32
    %c0_i32_1 = arith.constant 0 : i32
    return %c0_i32, %c0_i32_0 : i32, i32
  }
  func.func @transform_5(%arg0: i32) -> (i32, i32) {
    %c0_i32 = arith.constant 0 : i32
    %c0_i32_0 = arith.constant 0 : i32
    return %arg0, %c0_i32 : i32, i32
  }
}

</mosaic_0001>

<llo_original>
// kernel: tpu_custom_call.1
$region0: #{tpu_custom_call.1}
  #allocation0 [shape = 'u32[]', space=smem, size = 0x4, offset = 0x4, fixed_abs, tag = 'smem constant byte address 0x4 - core index']
  #allocation1 [shape = 'u32[144,128]{1,0:T(1,128)}', space=vmem, size = 0x12000, scoped, tag = 'internal scratch']
  %s0 = inlined_call_operand.vmem [shape: bf16[2,16], index: 0, kind: input, shape index: {}]
  %s1 = inlined_call_operand.vmem [shape: bf16[16,128], index: 1, kind: input, shape index: {}]
  %s2 = inlined_call_operand.vmem [shape: f32[1,128], index: 2, kind: input, shape index: {}]
  %s3 = inlined_call_operand.vmem [shape: bf16[128,8], index: 3, kind: input, shape index: {}]
  %s4 = inlined_call_operand.vmem [shape: f32[1,8], index: 4, kind: input, shape index: {}]
  %s5 = inlined_call_operand.hbm [shape: f32[2,8], index: 5, kind: output, shape index: {}]
  %s6 = sld [smem:[#allocation0]]
  $region30: #{tpu_custom_call.1} parent=0
    _
  %s8 = ssub.s32 1, %s6
  %s9 = scalar_select 0, %s8, %s6
  $region1: #{tpu_custom_call.1} parent=0
    #allocation2 [shape = 'u8[1024]{0}', space=vmem, size = 0x400, scoped, tag = 'output window, operand 0, single buffered']
    #allocation3 [shape = 's32[1]{0}', space=sflag, size = 0x4, scoped, tag = 'scoped memory for tpu_custom_call.1']
    %10 = vsyncpa [#allocation3], 0
    // Predicated region
    $region2: #{tpu_custom_call.1} parent=1 // pred_check
      _
    $region3: #{tpu_custom_call.1} parent=1 // pred_check_branch
      %12 = sbr.rel (0) target = $region5
    $region4: #{tpu_custom_call.1} parent=1 // pred_region
      _
    $region5: #{tpu_custom_call.1} parent=1 // pred_fallthru
      _
    // Predicated region
    $region6: #{tpu_custom_call.1} parent=1 // pred_check
      _
    $region7: #{tpu_custom_call.1} parent=1 // pred_check_branch
      %14 = sbr.rel (0) target = $region9
    $region8: #{tpu_custom_call.1} parent=1 // pred_region
      _
    $region9: #{tpu_custom_call.1} parent=1 // pred_fallthru
      _
    // Predicated region
    $region10: #{tpu_custom_call.1} parent=1 // pred_check
      _
    $region11: #{tpu_custom_call.1} parent=1 // pred_check_branch
      %16 = sbr.rel (0) target = $region13
    $region12: #{tpu_custom_call.1} parent=1 // pred_region
      _
    $region13: #{tpu_custom_call.1} parent=1 // pred_fallthru
      _
    // Predicated region
    $region14: #{tpu_custom_call.1} parent=1 // pred_check
      _
    $region15: #{tpu_custom_call.1} parent=1 // pred_check_branch
      %18 = sbr.rel (0) target = $region17
    $region16: #{tpu_custom_call.1} parent=1 // pred_region
      _
    $region17: #{tpu_custom_call.1} parent=1 // pred_fallthru
      _
    // Predicated region
    $region18: #{tpu_custom_call.1} parent=1 // pred_check
      _
    $region19: #{tpu_custom_call.1} parent=1 // pred_check_branch
      %20 = sbr.rel (0) target = $region21
    $region20: #{tpu_custom_call.1} parent=1 // pred_region
      _
    $region21: #{tpu_custom_call.1} parent=1 // pred_fallthru
      _
    %v22 = vld [vmem:[%s0] sm:$0x1]
    %v23 = vld [vmem:[%s1] sm:$0xf]
    %v24 = vld [vmem:[%s1 + $0x4] sm:$0xf]
    %v25 = vld [vmem:[%s2] sm:$0x1]
    %v27 = vlaneseq
    %v28 = vshrl.u32 %v27, 7
    %v29 = vsub.s32 0, %v28
    %v30 = vrot.slane %v25, %v29
    %v34 = vunpack.c.l.b16 %v23
    %v35 = vunpack.c.l.b16 %v24
    %v36 = vpack.c.b16 %v35, %v34
    %vm38 = vcmask 130048
    %v40 = vsel %vm38, %v22, 0
    %42 = vmatprep.subr.bf16.mxu0 0
    %43 = vmatpush1.bf16.msra.mxu0 %v36
    %44 = vmatprep.subr.bf16.mxu0 0
    %45 = vmatpush1.bf16.msra.mxu0 0
    %46 = vmatprep.subr.bf16.mxu0 0
    %47 = vmatpush1.bf16.msra.mxu0 0
    %48 = vmatprep.subr.bf16.mxu0 0
    %49 = vmatpush1.bf16.msra.mxu0 0
    %50 = vmatprep.subr.bf16.mxu0 0
    %51 = vmatpush1.bf16.msra.mxu0 0
    %52 = vmatprep.subr.bf16.mxu0 0
    %53 = vmatpush1.bf16.msra.mxu0 0
    %54 = vmatprep.subr.bf16.mxu0 0
    %55 = vmatpush1.bf16.msra.mxu0 0
    %56 = vmatprep.subr.bf16.mxu0 0
    %57 = vmatpush1.bf16.msra.mxu0 0
    %58 = vmatprep.subr.bf16.mxu0 0
    %59 = vmatpush1.bf16.msra.mxu0 0
    %60 = vmatprep.subr.bf16.mxu0 0
    %61 = vmatpush1.bf16.msra.mxu0 0
    %62 = vmatprep.subr.bf16.mxu0 0
    %63 = vmatpush1.bf16.msra.mxu0 0
    %64 = vmatprep.subr.bf16.mxu0 0
    %65 = vmatpush1.bf16.msra.mxu0 0
    %66 = vmatprep.subr.bf16.mxu0 0
    %67 = vmatpush1.bf16.msra.mxu0 0
    %68 = vmatprep.subr.bf16.mxu0 0
    %69 = vmatpush1.bf16.msra.mxu0 0
    %70 = vmatprep.subr.bf16.mxu0 0
    %71 = vmatpush1.bf16.msra.mxu0 0
    %72 = vmatprep.subr.bf16.mxu0 0
    %73 = vmatpush1.bf16.msra.mxu0 0
    %74 = vmatprep.mubr.bf16.mxu0 0
    %75 = vmatmul.mubr.bf16.gmra.mrb[0].mxu0 %v40
    %v76 = vpop.f32.mrb[0].mxu0
    %v77 = vadd.f32 %v30, %v76
    %v78 = vpop.f32.mrb[0].mxu0
    %v79 = vpop.f32.mrb[0].mxu0
    %v80 = vpop.f32.mrb[0].mxu0
    %81 = vdwg.mxu0
    %v82 = vmax.f32 %v77, 0.0
    %v83 = vpack.c.bf16 %v82, %v82
    %v84 = vld [vmem:[%s3] sm:$0xf]
    %v85 = vld [vmem:[%s3 + $0x4] sm:$0xf]
    %v86 = vld [vmem:[%s3 + $0x8] sm:$0xf]
    %v87 = vld [vmem:[%s3 + $0xc] sm:$0xf]
    %v88 = vld [vmem:[%s3 + $0x10] sm:$0xf]
    %v89 = vld [vmem:[%s3 + $0x14] sm:$0xf]
    %v90 = vld [vmem:[%s3 + $0x18] sm:$0xf]
    %v91 = vld [vmem:[%s3 + $0x1c] sm:$0xf]
    %v92 = vld [vmem:[%s3 + $0x20] sm:$0xf]
    %v93 = vld [vmem:[%s3 + $0x24] sm:$0xf]
    %v94 = vld [vmem:[%s3 + $0x28] sm:$0xf]
    %v95 = vld [vmem:[%s3 + $0x2c] sm:$0xf]
    %v96 = vld [vmem:[%s3 + $0x30] sm:$0xf]
    %v97 = vld [vmem:[%s3 + $0x34] sm:$0xf]
    %v98 = vld [vmem:[%s3 + $0x38] sm:$0xf]
    %v99 = vld [vmem:[%s3 + $0x3c] sm:$0xf]
    %v100 = vld [vmem:[%s4] sm:$0x1]
    %v102 = vlaneseq
    %v103 = vshrl.u32 %v102, 7
    %v104 = vsub.s32 0, %v103
    %v105 = vrot.slane %v100, %v104
    %v123 = vunpack.c.l.b16 %v84
    %v124 = vunpack.c.l.b16 %v85
    %v125 = vunpack.c.l.b16 %v86
    %v126 = vunpack.c.l.b16 %v87
    %v127 = vunpack.c.l.b16 %v88
    %v128 = vunpack.c.l.b16 %v89
    %v129 = vunpack.c.l.b16 %v90
    %v130 = vunpack.c.l.b16 %v91
    %v131 = vunpack.c.l.b16 %v92
    %v132 = vunpack.c.l.b16 %v93
    %v133 = vunpack.c.l.b16 %v94
    %v134 = vunpack.c.l.b16 %v95
    %v135 = vunpack.c.l.b16 %v96
    %v136 = vunpack.c.l.b16 %v97
    %v137 = vunpack.c.l.b16 %v98
    %v138 = vunpack.c.l.b16 %v99
    %v139 = vpack.c.b16 %v124, %v123
    %v140 = vpack.c.b16 %v126, %v125
    %v141 = vpack.c.b16 %v128, %v127
    %v142 = vpack.c.b16 %v130, %v129
    %v143 = vpack.c.b16 %v132, %v131
    %v144 = vpack.c.b16 %v134, %v133
    %v145 = vpack.c.b16 %v136, %v135
    %v146 = vpack.c.b16 %v138, %v137
    %155 = vmatprep.subr.bf16.mxu0 0
    %156 = vmatpush1.bf16.msra.mxu0 %v139
    %157 = vmatprep.subr.bf16.mxu0 0
    %158 = vmatpush1.bf16.msra.mxu0 %v140
    %159 = vmatprep.subr.bf16.mxu0 0
    %160 = vmatpush1.bf16.msra.mxu0 %v141
    %161 = vmatprep.subr.bf16.mxu0 0
    %162 = vmatpush1.bf16.msra.mxu0 %v142
    %163 = vmatprep.subr.bf16.mxu0 0
    %164 = vmatpush1.bf16.msra.mxu0 %v143
    %165 = vmatprep.subr.bf16.mxu0 0
    %166 = vmatpush1.bf16.msra.mxu0 %v144
    %167 = vmatprep.subr.bf16.mxu0 0
    %168 = vmatpush1.bf16.msra.mxu0 %v145
    %169 = vmatprep.subr.bf16.mxu0 0
    %170 = vmatpush1.bf16.msra.mxu0 %v146
    %171 = vmatprep.subr.bf16.mxu0 0
    %172 = vmatpush1.bf16.msra.mxu0 0
    %173 = vmatprep.subr.bf16.mxu0 0
    %174 = vmatpush1.bf16.msra.mxu0 0
    %175 = vmatprep.subr.bf16.mxu0 0
    %176 = vmatpush1.bf16.msra.mxu0 0
    %177 = vmatprep.subr.bf16.mxu0 0
    %178 = vmatpush1.bf16.msra.mxu0 0
    %179 = vmatprep.subr.bf16.mxu0 0
    %180 = vmatpush1.bf16.msra.mxu0 0
    %181 = vmatprep.subr.bf16.mxu0 0
    %182 = vmatpush1.bf16.msra.mxu0 0
    %183 = vmatprep.subr.bf16.mxu0 0
    %184 = vmatpush1.bf16.msra.mxu0 0
    %185 = vmatprep.subr.bf16.mxu0 0
    %186 = vmatpush1.bf16.msra.mxu0 0
    %187 = vmatprep.mubr.bf16.mxu0 0
    %188 = vmatmul.mubr.bf16.gmra.mrb[0].mxu0 %v83
    %v189 = vpop.f32.mrb[0].mxu0
    %v190 = vadd.f32 %v105, %v189
    %v191 = vpop.f32.mrb[0].mxu0
    %v192 = vpop.f32.mrb[0].mxu0
    %v193 = vpop.f32.mrb[0].mxu0
    %194 = vdwg.mxu0
    %vm195 = vcmask 58368
    %196 = vst.msk [vmem:[#allocation2] sm:$0x3] %vm195, %v190
    // Predicated region
    $region22: #{tpu_custom_call.1} parent=1 // pred_check
      _
    $region23: #{tpu_custom_call.1} parent=1 // pred_check_branch
      %198 = sbr.rel (0) target = $region25
    $region24: #{tpu_custom_call.1} parent=1 // pred_region
      %s200 = ssub.s32 32, 32
      %201 = vsyncadd [#allocation3], %s200
      %s203 = sshll.u32 [#allocation2], 4
      %s204 = int_to_ptr.vmem [resolvable:$true] %s203
      %206 = dma.vmem_to_hbm [thread:$0]  %s204, 32, %s5, [#allocation3]
    $region25: #{tpu_custom_call.1} parent=1 // pred_fallthru
      _
    // Predicated region
    $region26: #{tpu_custom_call.1} parent=1 // pred_check
      _
    $region27: #{tpu_custom_call.1} parent=1 // pred_check_branch
      %208 = sbr.rel (0) target = $region29
    $region28: #{tpu_custom_call.1} parent=1 // pred_region
      %209 = dma.done [#allocation3], 32
    $region29: #{tpu_custom_call.1} parent=1 // pred_fallthru
      _
    %210 = vsyncpa [#allocation3], 1

</llo_original>
